<compile_context>
chip_gen: v5e
topology: v5e:2x2
jax: 0.10.0
libtpu: 0.0.40
codegen_flags: <defaults>
</compile_context>

<pallas_src>
import functools

import jax
import jax.numpy as jnp
from jax import lax
from jax.experimental import pallas as pl
from jax.experimental.pallas import tpu as pltpu


# ----------------------------------------------------------------------------
# Pass 1: streaming O(B*D) stats.
#   outputs: base bandwidth (1,1) + per-row squared norms of X and Y in both
#   sublane (B,1) and lane (1,B) layouts (consumed by pass 2).
# ----------------------------------------------------------------------------
def _stats_kernel(x_ref, y_ref,
                  bw_ref, xns_ref, yns_ref, xnl_ref, ynl_ref,
                  sxx_ref, syy_ref, vx_ref, vy_ref, *, n_rows):
    i = pl.program_id(0)
    f32 = jnp.float32

    @pl.when(i == 0)
    def _init():
        sxx_ref[...] = jnp.zeros_like(sxx_ref)
        syy_ref[...] = jnp.zeros_like(syy_ref)
        vx_ref[...] = jnp.zeros_like(vx_ref)
        vy_ref[...] = jnp.zeros_like(vy_ref)

    X = x_ref[...].astype(f32)                       # (t1, D)
    Y = y_ref[...].astype(f32)
    Xsq = X * X
    Ysq = Y * Y

    # Per-row squared norms.  Sublane layout via an axis-1 reduce; lane layout
    # via a skinny MXU matmul (avoids an XLU transpose of a (t1, 1) vector).
    dims = (((1,), (1,)), ((), ()))
    ones_row = jnp.ones((1, X.shape[1]), f32)
    xns_ref[...] = jnp.sum(Xsq, axis=1, keepdims=True)                               # (t1, 1)
    yns_ref[...] = jnp.sum(Ysq, axis=1, keepdims=True)
    xnl_ref[...] = lax.dot_general(ones_row, Xsq, dims, preferred_element_type=f32)  # (1, t1)
    ynl_ref[...] = lax.dot_general(ones_row, Ysq, dims, preferred_element_type=f32)

    # Streaming accumulators, kept (1, D); reduced to scalars only at finalize.
    sxx_ref[...] += jnp.sum(Xsq, axis=0, keepdims=True)
    syy_ref[...] += jnp.sum(Ysq, axis=0, keepdims=True)
    vx_ref[...] += jnp.sum(X, axis=0, keepdims=True)
    vy_ref[...] += jnp.sum(Y, axis=0, keepdims=True)

    @pl.when(i == pl.num_programs(0) - 1)
    def _finalize():
        b = float(n_rows)
        sx2 = jnp.sum(sxx_ref[...], keepdims=True)   # (1,1)  sum_i ||x_i||^2
        sy2 = jnp.sum(syy_ref[...], keepdims=True)
        vx = vx_ref[...]
        vy = vy_ref[...]
        g_xx = jnp.sum(vx * vx, keepdims=True)       # || sum_i x_i ||^2
        g_yy = jnp.sum(vy * vy, keepdims=True)
        g_xy = jnp.sum(vx * vy, keepdims=True)
        # diag(D_xx) == diag(D_yy) == 0, so unmasked sums equal off-diag sums.
        # NOTE: the analytic form loses f32 precision if the data carries a very
        # large common offset; fine for typical (roughly centered) features.
        sum_dxx = 2.0 * b * sx2 - 2.0 * g_xx
        sum_dyy = 2.0 * b * sy2 - 2.0 * g_yy
        sum_dxy = b * sx2 + b * sy2 - 2.0 * g_xy
        denom = 2.0 * b * (b - 1.0) + 2.0 * b * b
        bw_ref[...] = (sum_dxx + sum_dyy + 2.0 * sum_dxy) / denom


# ----------------------------------------------------------------------------
# Pass 2: one (tm, tn) tile of K_xx, K_xy, K_yy per grid point.
# ----------------------------------------------------------------------------
def _rbf_tile_kernel(bw_ref, xi_ref, xj_ref, yi_ref, yj_ref,
                     xin_ref, xjn_ref, yin_ref, yjn_ref,
                     kxx_ref, kxy_ref, kyy_ref, *, n_kernels, mul_factor):
    f32 = jnp.float32
    bw = bw_ref[0, 0]                                # scalar from SMEM

    # Gram tiles straight from the native-dtype panels (no f32 pre-cast copies);
    # accumulation forced to f32.  Feature dim contracted on both sides -> A @ B.T
    # without a materialized transpose.
    dims = (((1,), (1,)), ((), ()))
    g_xx = lax.dot_general(xi_ref[...], xj_ref[...], dims, preferred_element_type=f32)
    g_yy = lax.dot_general(yi_ref[...], yj_ref[...], dims, preferred_element_type=f32)
    g_xy = lax.dot_general(xi_ref[...], yj_ref[...], dims, preferred_element_type=f32)

    xi_n = xin_ref[...].astype(f32)                  # (tm, 1) precomputed in pass 1
    yi_n = yin_ref[...].astype(f32)
    xj_n = xjn_ref[...].astype(f32)                  # (1, tn) precomputed in pass 1
    yj_n = yjn_ref[...].astype(f32)

    # Clamp tiny negative values from cancellation (diagonal is the worst case)
    # so exp(-d/bw) never exceeds 1.
    d_xx = jnp.maximum(xi_n + xj_n - 2.0 * g_xx, 0.0)
    d_yy = jnp.maximum(yi_n + yj_n - 2.0 * g_yy, 0.0)
    d_xy = jnp.maximum(xi_n + yj_n - 2.0 * g_xy, 0.0)

    n_half = n_kernels // 2
    if float(mul_factor) == 2.0:
        # Bandwidths bw * 2**(k - n//2): with E = exp(-d / bw_max) every term is
        # E**(2**m) -> one exp + (n_kernels-1) squarings per matrix (5x less EUP
        # work for the default config; the multiplies fill spare VALU slots).
        inv_top = 1.0 / (bw * (2.0 ** (n_kernels - 1 - n_half)))

        def multi_rbf(d):
            e = jnp.exp(-d * inv_top)
            acc = e
            cur = e
            for _ in range(n_kernels - 1):
                cur = cur * cur
                acc = acc + cur
            return acc
    else:
        # Generic mul_factor path keeps one exp per bandwidth.
        def multi_rbf(d):
            acc = jnp.zeros_like(d)
            for k in range(n_kernels):
                inv = 1.0 / (bw * (float(mul_factor) ** (k - n_half)))
                acc = acc + jnp.exp(-d * inv)
            return acc

    kxx_ref[...] = multi_rbf(d_xx).astype(kxx_ref.dtype)
    kxy_ref[...] = multi_rbf(d_xy).astype(kxy_ref.dtype)
    kyy_ref[...] = multi_rbf(d_yy).astype(kyy_ref.dtype)


# ----------------------------------------------------------------------------
# Tiling / VMEM planning.
# ----------------------------------------------------------------------------
def _vmem_limit(bytes_needed):
    # Defaults are ~16 MiB (v5e) / ~32 MiB (v6e/v7x) scoped VMEM; raise explicitly
    # but clamp to 64 MiB so the request stays legal on v7x (64 MiB physical).
    return int(min(max(bytes_needed + (8 << 20), 32 << 20), 64 << 20))


def _plan_pass2_tiles(B, D, in_itemsize, out_itemsize):
    """Pick (padded_B, tm, tn) for the (B, B) outputs.

    * lane/MXU aligned tiles (tm <= 512, tn <= 256) when the padded batch allows,
    * B padded up to a multiple of 128 for large unaligned batches (keeps the
      software pipeline and the megacore split); small batches use one full block,
    * tm/tn capped so double-buffered panels + output tiles fit a VMEM budget
      that is safe on every generation.
    """
    pb = B if (B % 128 == 0 or B <= 256) else (-(-B // 128) * 128)

    if pb % 128 != 0:
        return pb, pb, pb                     # single full-size block (tiny B)

    tm = next(t for t in (512, 256, 128) if pb % t == 0)
    tn = next(t for t in (256, 128) if pb % t == 0)
    # v7x megacore: make sure at least one "parallel" axis has >= 2 blocks.
    if pb // tm == 1 and pb // tn == 1 and pb >= 256:
        tm = pb // 2

    def need(tm_, tn_):
        return (2 * 2 * (tm_ + tn_) * D * in_itemsize      # double-buffered X/Y panels
                + 3 * 2 * tm_ * tn_ * out_itemsize)        # double-buffered output tiles

    budget = 48 << 20                                      # safe even on v7x
    while need(tm, tn) > budget and tm > 128:
        tm //= 2
    while need(tm, tn) > budget and tn > 128:
        tn //= 2
    return pb, tm, tn


@functools.partial(jax.jit, static_argnames=("n_kernels", "mul_factor", "out_dtype"))
def efficient_rbf(X, Y, n_kernels=5, mul_factor=2.0, out_dtype=jnp.float32):
    """Pallas implementation of EfficientRBF.forward -> (K_xx, K_xy, K_yy)."""
    B, D = X.shape
    assert Y.shape == (B, D)
    assert n_kernels >= 1

    f32 = jnp.float32
    in_isz = jnp.dtype(X.dtype).itemsize
    out_isz = jnp.dtype(out_dtype).itemsize
    pb, tm, tn = _plan_pass2_tiles(B, D, in_isz, out_isz)

    if pb != B:
        # Zero-padded rows contribute nothing to the pass-1 sums (their norms are
        # zero) and the padded output rows/cols are sliced off below.
        Xp = jnp.pad(X, ((0, pb - B), (0, 0)))
        Yp = jnp.pad(Y, ((0, pb - B), (0, 0)))
    else:
        Xp, Yp = X, Y

    # ---- pass 1: base bandwidth + per-row squared norms (streaming) ---------
    t1 = next((t for t in (512, 256, 128) if pb % t == 0), pb)
    base_bw, xn_sub, yn_sub, xn_lane, yn_lane = pl.pallas_call(
        functools.partial(_stats_kernel, n_rows=B),
        out_shape=(
            jax.ShapeDtypeStruct((1, 1), f32),
            jax.ShapeDtypeStruct((pb, 1), f32),
            jax.ShapeDtypeStruct((pb, 1), f32),
            jax.ShapeDtypeStruct((1, pb), f32),
            jax.ShapeDtypeStruct((1, pb), f32),
        ),
        grid=(pb // t1,),
        in_specs=[
            pl.BlockSpec((t1, D), lambda i: (i, 0)),
            pl.BlockSpec((t1, D), lambda i: (i, 0)),
        ],
        out_specs=(
            pl.BlockSpec((1, 1), lambda i: (0, 0)),
            pl.BlockSpec((t1, 1), lambda i: (i, 0)),
            pl.BlockSpec((t1, 1), lambda i: (i, 0)),
            pl.BlockSpec((1, t1), lambda i: (0, i)),
            pl.BlockSpec((1, t1), lambda i: (0, i)),
        ),
        scratch_shapes=[
            pltpu.VMEM((1, D), f32),   # sum_i x_i^2 (per feature)
            pltpu.VMEM((1, D), f32),   # sum_i y_i^2
            pltpu.VMEM((1, D), f32),   # sum_i x_i
            pltpu.VMEM((1, D), f32),   # sum_i y_i
        ],
        compiler_params=pltpu.CompilerParams(
            dimension_semantics=("arbitrary",),
            vmem_limit_bytes=_vmem_limit(2 * 2 * t1 * D * in_isz),
        ),
    )(Xp, Yp)

    # ---- pass 2: tiled kernel matrices ---------------------------------------
    grid_m, grid_n = pb // tm, pb // tn
    k_spec = pl.BlockSpec((tm, tn), lambda i, j: (i, j))
    out_shape = tuple(jax.ShapeDtypeStruct((pb, pb), out_dtype) for _ in range(3))

    vmem_need = (2 * 2 * (tm + tn) * D * in_isz
                 + 3 * 2 * tm * tn * out_isz
                 + 4 * 2 * (tm + tn) * 4)
    cost = pl.CostEstimate(
        flops=int(3 * 2 * pb * pb * D + 12 * pb * pb),
        transcendentals=int(3 * pb * pb * (1 if float(mul_factor) == 2.0 else n_kernels)),
        bytes_accessed=int(2 * pb * D * in_isz * (1 + grid_m) + 3 * pb * pb * out_isz),
    )

    K_xx, K_xy, K_yy = pl.pallas_call(
        functools.partial(_rbf_tile_kernel, n_kernels=n_kernels, mul_factor=mul_factor),
        out_shape=out_shape,
        grid=(grid_m, grid_n),
        in_specs=[
            pl.BlockSpec(memory_space=pltpu.MemorySpace.SMEM),   # base_bw (1,1)
            pl.BlockSpec((tm, D), lambda i, j: (i, 0)),          # X row panel
            pl.BlockSpec((tn, D), lambda i, j: (j, 0)),          # X col panel
            pl.BlockSpec((tm, D), lambda i, j: (i, 0)),          # Y row panel
            pl.BlockSpec((tn, D), lambda i, j: (j, 0)),          # Y col panel
            pl.BlockSpec((tm, 1), lambda i, j: (i, 0)),          # ||x||^2 row norms
            pl.BlockSpec((1, tn), lambda i, j: (0, j)),          # ||x||^2 col norms
            pl.BlockSpec((tm, 1), lambda i, j: (i, 0)),          # ||y||^2 row norms
            pl.BlockSpec((1, tn), lambda i, j: (0, j)),          # ||y||^2 col norms
        ],
        out_specs=(k_spec, k_spec, k_spec),
        compiler_params=pltpu.CompilerParams(
            dimension_semantics=("parallel", "parallel"),
            vmem_limit_bytes=_vmem_limit(vmem_need),
        ),
        cost_estimate=cost,
    )(base_bw, Xp, Xp, Yp, Yp, xn_sub, xn_lane, yn_sub, yn_lane)

    if pb != B:
        K_xx = K_xx[:B, :B]
        K_xy = K_xy[:B, :B]
        K_yy = K_yy[:B, :B]
    return K_xx, K_xy, K_yy


# ----------------------------------------------------------------------------
# Pure-JAX reference mirroring the PyTorch module exactly (mask + per-bw exps).
# ----------------------------------------------------------------------------
def _reference_rbf(X, Y, n_kernels=5, mul_factor=2.0):
    X = X.astype(jnp.float32)
    Y = Y.astype(jnp.float32)
    B = X.shape[0]
    xn = jnp.sum(X * X, 1, keepdims=True)
    yn = jnp.sum(Y * Y, 1, keepdims=True)
    D_xx = xn + xn.T - 2.0 * X @ X.T
    D_yy = yn + yn.T - 2.0 * Y @ Y.T
    D_xy = xn + yn.T - 2.0 * X @ Y.T
    mask = ~jnp.eye(B, dtype=bool)
    total = (jnp.where(mask, D_xx, 0.0).sum()
             + jnp.where(mask, D_yy, 0.0).sum()
             + 2.0 * D_xy.sum())
    numel = 2 * B * (B - 1) + 2 * B * B
    base_bw = total / numel
    bws = base_bw * (mul_factor ** (jnp.arange(n_kernels) - n_kernels // 2))
    K_xx = sum(jnp.exp(-D_xx / s) for s in bws)
    K_xy = sum(jnp.exp(-D_xy / s) for s in bws)
    K_yy = sum(jnp.exp(-D_yy / s) for s in bws)
    return K_xx, K_xy, K_yy


if __name__ == "__main__":
    key = jax.random.PRNGKey(0)
    kx, ky = jax.random.split(key)

    B, D = 8, 32
    X = jax.random.normal(kx, (B, D), dtype=jnp.float32)
    Y = jax.random.normal(ky, (B, D), dtype=jnp.float32) + 0.5

    K_xx, K_xy, K_yy = jax.block_until_ready(efficient_rbf(X, Y))

    R_xx, R_xy, R_yy = _reference_rbf(X, Y)
    assert jnp.allclose(K_xx, R_xx, rtol=1e-4, atol=1e-5)
    assert jnp.allclose(K_xy, R_xy, rtol=1e-4, atol=1e-5)
    assert jnp.allclose(K_yy, R_yy, rtol=1e-4, atol=1e-5)

    print("KERNEL_OK")
</pallas_src>

<mosaic_0001>
module attributes {stable_mosaic.version = 11 : i64} {
  func.func @_rbf_tile_kernel(%arg0: i32, %arg1: i32, %arg2: memref<1x1xf32, #tpu.memory_space<smem>>, %arg3: memref<8x32xf32, #tpu.memory_space<vmem>>, %arg4: memref<8x32xf32, #tpu.memory_space<vmem>>, %arg5: memref<8x32xf32, #tpu.memory_space<vmem>>, %arg6: memref<8x32xf32, #tpu.memory_space<vmem>>, %arg7: memref<8x1xf32, #tpu.memory_space<vmem>>, %arg8: memref<1x8xf32, #tpu.memory_space<vmem>>, %arg9: memref<8x1xf32, #tpu.memory_space<vmem>>, %arg10: memref<1x8xf32, #tpu.memory_space<vmem>>, %arg11: memref<8x8xf32, #tpu.memory_space<vmem>>, %arg12: memref<8x8xf32, #tpu.memory_space<vmem>>, %arg13: memref<8x8xf32, #tpu.memory_space<vmem>>) attributes {dimension_semantics = [#tpu.dimension_semantics<parallel>, #tpu.dimension_semantics<parallel>], iteration_bounds = array<i64: 1, 1>, scalar_prefetch = 0 : i64, scratch_operands = 0 : i64, tpu.core_type = #tpu.core_type<tc>, window_params = [{transform_indices = @transform_0, window_bounds = array<i64: 1, 1>}, {transform_indices = @transform_1, window_bounds = array<i64: 8, 32>}, {transform_indices = @transform_2, window_bounds = array<i64: 8, 32>}, {transform_indices = @transform_3, window_bounds = array<i64: 8, 32>}, {transform_indices = @transform_4, window_bounds = array<i64: 8, 32>}, {transform_indices = @transform_5, window_bounds = array<i64: 8, 1>}, {transform_indices = @transform_6, window_bounds = array<i64: 1, 8>}, {transform_indices = @transform_7, window_bounds = array<i64: 8, 1>}, {transform_indices = @transform_8, window_bounds = array<i64: 1, 8>}, {transform_indices = @transform_9, window_bounds = array<i64: 8, 8>}, {transform_indices = @transform_10, window_bounds = array<i64: 8, 8>}, {transform_indices = @transform_11, window_bounds = array<i64: 8, 8>}]} {
    %c0 = arith.constant 0 : index
    %c0_0 = arith.constant 0 : index
    %0 = memref.load %arg2[%c0, %c0_0] : memref<1x1xf32, #tpu.memory_space<smem>>
    %c0_1 = arith.constant 0 : index
    %c0_2 = arith.constant 0 : index
    %1 = vector.load %arg3[%c0_1, %c0_2] : memref<8x32xf32, #tpu.memory_space<vmem>>, vector<8x32xf32>
    %c0_3 = arith.constant 0 : index
    %c0_4 = arith.constant 0 : index
    %2 = vector.load %arg4[%c0_3, %c0_4] : memref<8x32xf32, #tpu.memory_space<vmem>>, vector<8x32xf32>
    %cst = arith.constant dense<0.000000e+00> : vector<8x8xf32>
    %3 = tpu.matmul %1, %2, %cst {dimension_numbers = #tpu.dot_dimension_numbers<[1], [1], [0], [0], [0, 0, 1, 0], [], []>} : vector<8x32xf32>, vector<8x32xf32>, vector<8x8xf32> -> vector<8x8xf32>
    %c0_5 = arith.constant 0 : index
    %c0_6 = arith.constant 0 : index
    %4 = vector.load %arg5[%c0_5, %c0_6] : memref<8x32xf32, #tpu.memory_space<vmem>>, vector<8x32xf32>
    %c0_7 = arith.constant 0 : index
    %c0_8 = arith.constant 0 : index
    %5 = vector.load %arg6[%c0_7, %c0_8] : memref<8x32xf32, #tpu.memory_space<vmem>>, vector<8x32xf32>
    %cst_9 = arith.constant dense<0.000000e+00> : vector<8x8xf32>
    %6 = tpu.matmul %4, %5, %cst_9 {dimension_numbers = #tpu.dot_dimension_numbers<[1], [1], [0], [0], [0, 0, 1, 0], [], []>} : vector<8x32xf32>, vector<8x32xf32>, vector<8x8xf32> -> vector<8x8xf32>
    %c0_10 = arith.constant 0 : index
    %c0_11 = arith.constant 0 : index
    %7 = vector.load %arg3[%c0_10, %c0_11] : memref<8x32xf32, #tpu.memory_space<vmem>>, vector<8x32xf32>
    %c0_12 = arith.constant 0 : index
    %c0_13 = arith.constant 0 : index
    %8 = vector.load %arg6[%c0_12, %c0_13] : memref<8x32xf32, #tpu.memory_space<vmem>>, vector<8x32xf32>
    %cst_14 = arith.constant dense<0.000000e+00> : vector<8x8xf32>
    %9 = tpu.matmul %7, %8, %cst_14 {dimension_numbers = #tpu.dot_dimension_numbers<[1], [1], [0], [0], [0, 0, 1, 0], [], []>} : vector<8x32xf32>, vector<8x32xf32>, vector<8x8xf32> -> vector<8x8xf32>
    %c0_15 = arith.constant 0 : index
    %c0_16 = arith.constant 0 : index
    %10 = vector.load %arg7[%c0_15, %c0_16] : memref<8x1xf32, #tpu.memory_space<vmem>>, vector<8x1xf32>
    %c0_17 = arith.constant 0 : index
    %c0_18 = arith.constant 0 : index
    %11 = vector.load %arg9[%c0_17, %c0_18] : memref<8x1xf32, #tpu.memory_space<vmem>>, vector<8x1xf32>
    %c0_19 = arith.constant 0 : index
    %c0_20 = arith.constant 0 : index
    %12 = vector.load %arg8[%c0_19, %c0_20] : memref<1x8xf32, #tpu.memory_space<vmem>>, vector<1x8xf32>
    %c0_21 = arith.constant 0 : index
    %c0_22 = arith.constant 0 : index
    %13 = vector.load %arg10[%c0_21, %c0_22] : memref<1x8xf32, #tpu.memory_space<vmem>>, vector<1x8xf32>
    %14 = vector.broadcast %10 : vector<8x1xf32> to vector<8x8xf32>
    %15 = vector.broadcast %12 : vector<1x8xf32> to vector<8x8xf32>
    %16 = arith.addf %14, %15 : vector<8x8xf32>
    %cst_23 = arith.constant 2.000000e+00 : f32
    %17 = vector.broadcast %cst_23 : f32 to vector<8x8xf32>
    %18 = arith.mulf %17, %3 : vector<8x8xf32>
    %19 = arith.subf %16, %18 : vector<8x8xf32>
    %cst_24 = arith.constant 0.000000e+00 : f32
    %20 = vector.broadcast %cst_24 : f32 to vector<8x8xf32>
    %21 = arith.maximumf %19, %20 : vector<8x8xf32>
    %22 = vector.broadcast %11 : vector<8x1xf32> to vector<8x8xf32>
    %23 = vector.broadcast %13 : vector<1x8xf32> to vector<8x8xf32>
    %24 = arith.addf %22, %23 : vector<8x8xf32>
    %cst_25 = arith.constant 2.000000e+00 : f32
    %25 = vector.broadcast %cst_25 : f32 to vector<8x8xf32>
    %26 = arith.mulf %25, %6 : vector<8x8xf32>
    %27 = arith.subf %24, %26 : vector<8x8xf32>
    %cst_26 = arith.constant 0.000000e+00 : f32
    %28 = vector.broadcast %cst_26 : f32 to vector<8x8xf32>
    %29 = arith.maximumf %27, %28 : vector<8x8xf32>
    %30 = vector.broadcast %10 : vector<8x1xf32> to vector<8x8xf32>
    %31 = vector.broadcast %13 : vector<1x8xf32> to vector<8x8xf32>
    %32 = arith.addf %30, %31 : vector<8x8xf32>
    %cst_27 = arith.constant 2.000000e+00 : f32
    %33 = vector.broadcast %cst_27 : f32 to vector<8x8xf32>
    %34 = arith.mulf %33, %9 : vector<8x8xf32>
    %35 = arith.subf %32, %34 : vector<8x8xf32>
    %cst_28 = arith.constant 0.000000e+00 : f32
    %36 = vector.broadcast %cst_28 : f32 to vector<8x8xf32>
    %37 = arith.maximumf %35, %36 : vector<8x8xf32>
    %cst_29 = arith.constant 4.000000e+00 : f32
    %38 = arith.mulf %0, %cst_29 : f32
    %cst_30 = arith.constant 1.000000e+00 : f32
    %39 = arith.divf %cst_30, %38 : f32
    %cst_31 = arith.constant 0.000000e+00 : f32
    %40 = vector.broadcast %cst_31 : f32 to vector<8x8xf32>
    %41 = arith.subf %40, %21 : vector<8x8xf32>
    %42 = vector.broadcast %39 : f32 to vector<8x8xf32>
    %43 = arith.mulf %41, %42 : vector<8x8xf32>
    %44 = math.exp %43 : vector<8x8xf32>
    %45 = arith.mulf %44, %44 : vector<8x8xf32>
    %46 = arith.addf %44, %45 : vector<8x8xf32>
    %47 = arith.mulf %45, %45 : vector<8x8xf32>
    %48 = arith.addf %46, %47 : vector<8x8xf32>
    %49 = arith.mulf %47, %47 : vector<8x8xf32>
    %50 = arith.addf %48, %49 : vector<8x8xf32>
    %51 = arith.mulf %49, %49 : vector<8x8xf32>
    %52 = arith.addf %50, %51 : vector<8x8xf32>
    %c0_32 = arith.constant 0 : index
    %c0_33 = arith.constant 0 : index
    %53 = vector.load %arg11[%c0_32, %c0_33] : memref<8x8xf32, #tpu.memory_space<vmem>>, vector<8x8xf32>
    tpu.vector_store %arg11[%c0_32, %c0_33], %52 {strides = array<i32>} : memref<8x8xf32, #tpu.memory_space<vmem>>, vector<8x8xf32>,
    %cst_34 = arith.constant 0.000000e+00 : f32
    %54 = vector.broadcast %cst_34 : f32 to vector<8x8xf32>
    %55 = arith.subf %54, %37 : vector<8x8xf32>
    %56 = vector.broadcast %39 : f32 to vector<8x8xf32>
    %57 = arith.mulf %55, %56 : vector<8x8xf32>
    %58 = math.exp %57 : vector<8x8xf32>
    %59 = arith.mulf %58, %58 : vector<8x8xf32>
    %60 = arith.addf %58, %59 : vector<8x8xf32>
    %61 = arith.mulf %59, %59 : vector<8x8xf32>
    %62 = arith.addf %60, %61 : vector<8x8xf32>
    %63 = arith.mulf %61, %61 : vector<8x8xf32>
    %64 = arith.addf %62, %63 : vector<8x8xf32>
    %65 = arith.mulf %63, %63 : vector<8x8xf32>
    %66 = arith.addf %64, %65 : vector<8x8xf32>
    %c0_35 = arith.constant 0 : index
    %c0_36 = arith.constant 0 : index
    %67 = vector.load %arg12[%c0_35, %c0_36] : memref<8x8xf32, #tpu.memory_space<vmem>>, vector<8x8xf32>
    tpu.vector_store %arg12[%c0_35, %c0_36], %66 {strides = array<i32>} : memref<8x8xf32, #tpu.memory_space<vmem>>, vector<8x8xf32>,
    %cst_37 = arith.constant 0.000000e+00 : f32
    %68 = vector.broadcast %cst_37 : f32 to vector<8x8xf32>
    %69 = arith.subf %68, %29 : vector<8x8xf32>
    %70 = vector.broadcast %39 : f32 to vector<8x8xf32>
    %71 = arith.mulf %69, %70 : vector<8x8xf32>
    %72 = math.exp %71 : vector<8x8xf32>
    %73 = arith.mulf %72, %72 : vector<8x8xf32>
    %74 = arith.addf %72, %73 : vector<8x8xf32>
    %75 = arith.mulf %73, %73 : vector<8x8xf32>
    %76 = arith.addf %74, %75 : vector<8x8xf32>
    %77 = arith.mulf %75, %75 : vector<8x8xf32>
    %78 = arith.addf %76, %77 : vector<8x8xf32>
    %79 = arith.mulf %77, %77 : vector<8x8xf32>
    %80 = arith.addf %78, %79 : vector<8x8xf32>
    %c0_38 = arith.constant 0 : index
    %c0_39 = arith.constant 0 : index
    %81 = vector.load %arg13[%c0_38, %c0_39] : memref<8x8xf32, #tpu.memory_space<vmem>>, vector<8x8xf32>
    tpu.vector_store %arg13[%c0_38, %c0_39], %80 {strides = array<i32>} : memref<8x8xf32, #tpu.memory_space<vmem>>, vector<8x8xf32>,
    return
  }
  func.func @transform_0(%arg0: i32, %arg1: i32) -> (i32, i32) {
    %c0_i32 = arith.constant 0 : i32
    %c0_i32_0 = arith.constant 0 : i32
    %c0_i32_1 = arith.constant 0 : i32
    return %c0_i32, %c0_i32_0 : i32, i32
  }
  func.func @transform_1(%arg0: i32, %arg1: i32) -> (i32, i32) {
    %c0_i32 = arith.constant 0 : i32
    %c0_i32_0 = arith.constant 0 : i32
    return %arg0, %c0_i32 : i32, i32
  }
  func.func @transform_2(%arg0: i32, %arg1: i32) -> (i32, i32) {
    %c0_i32 = arith.constant 0 : i32
    %c0_i32_0 = arith.constant 0 : i32
    return %arg1, %c0_i32 : i32, i32
  }
  func.func @transform_3(%arg0: i32, %arg1: i32) -> (i32, i32) {
    %c0_i32 = arith.constant 0 : i32
    %c0_i32_0 = arith.constant 0 : i32
    return %arg0, %c0_i32 : i32, i32
  }
  func.func @transform_4(%arg0: i32, %arg1: i32) -> (i32, i32) {
    %c0_i32 = arith.constant 0 : i32
    %c0_i32_0 = arith.constant 0 : i32
    return %arg1, %c0_i32 : i32, i32
  }
  func.func @transform_5(%arg0: i32, %arg1: i32) -> (i32, i32) {
    %c0_i32 = arith.constant 0 : i32
    %c0_i32_0 = arith.constant 0 : i32
    return %arg0, %c0_i32 : i32, i32
  }
  func.func @transform_6(%arg0: i32, %arg1: i32) -> (i32, i32) {
    %c0_i32 = arith.constant 0 : i32
    %c0_i32_0 = arith.constant 0 : i32
    return %c0_i32, %arg1 : i32, i32
  }
  func.func @transform_7(%arg0: i32, %arg1: i32) -> (i32, i32) {
    %c0_i32 = arith.constant 0 : i32
    %c0_i32_0 = arith.constant 0 : i32
    return %arg0, %c0_i32 : i32, i32
  }
  func.func @transform_8(%arg0: i32, %arg1: i32) -> (i32, i32) {
    %c0_i32 = arith.constant 0 : i32
    %c0_i32_0 = arith.constant 0 : i32
    return %c0_i32, %arg1 : i32, i32
  }
  func.func @transform_9(%arg0: i32, %arg1: i32) -> (i32, i32) {
    %c0_i32 = arith.constant 0 : i32
    return %arg0, %arg1 : i32, i32
  }
  func.func @transform_10(%arg0: i32, %arg1: i32) -> (i32, i32) {
    %c0_i32 = arith.constant 0 : i32
    return %arg0, %arg1 : i32, i32
  }
  func.func @transform_11(%arg0: i32, %arg1: i32) -> (i32, i32) {
    %c0_i32 = arith.constant 0 : i32
    return %arg0, %arg1 : i32, i32
  }
}

module attributes {stable_mosaic.version = 11 : i64} {
  func.func @_stats_kernel(%arg0: i32, %arg1: memref<8x32xf32, #tpu.memory_space<vmem>>, %arg2: memref<8x32xf32, #tpu.memory_space<vmem>>, %arg3: memref<1x1xf32, #tpu.memory_space<vmem>>, %arg4: memref<8x1xf32, #tpu.memory_space<vmem>>, %arg5: memref<8x1xf32, #tpu.memory_space<vmem>>, %arg6: memref<1x8xf32, #tpu.memory_space<vmem>>, %arg7: memref<1x8xf32, #tpu.memory_space<vmem>>, %arg8: memref<1x32xf32, #tpu.memory_space<vmem>>, %arg9: memref<1x32xf32, #tpu.memory_space<vmem>>, %arg10: memref<1x32xf32, #tpu.memory_space<vmem>>, %arg11: memref<1x32xf32, #tpu.memory_space<vmem>>) attributes {dimension_semantics = [#tpu.dimension_semantics<arbitrary>], iteration_bounds = array<i64: 1>, scalar_prefetch = 0 : i64, scratch_operands = 4 : i64, tpu.core_type = #tpu.core_type<tc>, window_params = [{transform_indices = @transform_0, window_bounds = array<i64: 8, 32>}, {transform_indices = @transform_1, window_bounds = array<i64: 8, 32>}, {pipeline_mode = #tpu.pipeline_mode<synchronous>, transform_indices = @transform_2, window_bounds = array<i64: 1, 1>}, {transform_indices = @transform_3, window_bounds = array<i64: 8, 1>}, {transform_indices = @transform_4, window_bounds = array<i64: 8, 1>}, {transform_indices = @transform_5, window_bounds = array<i64: 1, 8>}, {transform_indices = @transform_6, window_bounds = array<i64: 1, 8>}]} {
    %c0_i32 = arith.constant 0 : i32
    %0 = arith.cmpi eq, %arg0, %c0_i32 : i32
    %1 = arith.extui %0 : i1 to i32
    %c0_i32_0 = arith.constant 0 : i32
    %2 = arith.cmpi ne, %1, %c0_i32_0 : i32
    scf.if %2 {
      %cst_38 = arith.constant 0.000000e+00 : f32
      %41 = vector.broadcast %cst_38 : f32 to vector<1x32xf32>
      %c0_39 = arith.constant 0 : index
      %c0_40 = arith.constant 0 : index
      %42 = vector.load %arg8[%c0_39, %c0_40] : memref<1x32xf32, #tpu.memory_space<vmem>>, vector<1x32xf32>
      tpu.vector_store %arg8[%c0_39, %c0_40], %41 {strides = array<i32>} : memref<1x32xf32, #tpu.memory_space<vmem>>, vector<1x32xf32>,
      %cst_41 = arith.constant 0.000000e+00 : f32
      %43 = vector.broadcast %cst_41 : f32 to vector<1x32xf32>
      %c0_42 = arith.constant 0 : index
      %c0_43 = arith.constant 0 : index
      %44 = vector.load %arg9[%c0_42, %c0_43] : memref<1x32xf32, #tpu.memory_space<vmem>>, vector<1x32xf32>
      tpu.vector_store %arg9[%c0_42, %c0_43], %43 {strides = array<i32>} : memref<1x32xf32, #tpu.memory_space<vmem>>, vector<1x32xf32>,
      %cst_44 = arith.constant 0.000000e+00 : f32
      %45 = vector.broadcast %cst_44 : f32 to vector<1x32xf32>
      %c0_45 = arith.constant 0 : index
      %c0_46 = arith.constant 0 : index
      %46 = vector.load %arg10[%c0_45, %c0_46] : memref<1x32xf32, #tpu.memory_space<vmem>>, vector<1x32xf32>
      tpu.vector_store %arg10[%c0_45, %c0_46], %45 {strides = array<i32>} : memref<1x32xf32, #tpu.memory_space<vmem>>, vector<1x32xf32>,
      %cst_47 = arith.constant 0.000000e+00 : f32
      %47 = vector.broadcast %cst_47 : f32 to vector<1x32xf32>
      %c0_48 = arith.constant 0 : index
      %c0_49 = arith.constant 0 : index
      %48 = vector.load %arg11[%c0_48, %c0_49] : memref<1x32xf32, #tpu.memory_space<vmem>>, vector<1x32xf32>
      tpu.vector_store %arg11[%c0_48, %c0_49], %47 {strides = array<i32>} : memref<1x32xf32, #tpu.memory_space<vmem>>, vector<1x32xf32>,
    } else {
    }
    %c0 = arith.constant 0 : index
    %c0_1 = arith.constant 0 : index
    %3 = vector.load %arg1[%c0, %c0_1] : memref<8x32xf32, #tpu.memory_space<vmem>>, vector<8x32xf32>
    %c0_2 = arith.constant 0 : index
    %c0_3 = arith.constant 0 : index
    %4 = vector.load %arg2[%c0_2, %c0_3] : memref<8x32xf32, #tpu.memory_space<vmem>>, vector<8x32xf32>
    %5 = arith.mulf %3, %3 : vector<8x32xf32>
    %6 = arith.mulf %4, %4 : vector<8x32xf32>
    %cst = arith.constant 1.000000e+00 : f32
    %7 = vector.broadcast %cst : f32 to vector<1x32xf32>
    %cst_4 = arith.constant dense<0.000000e+00> : vector<8xf32>
    %8 = vector.multi_reduction <add>, %5, %cst_4 [1] : vector<8x32xf32> to vector<8xf32>
    %9 = vector.shape_cast %8 : vector<8xf32> to vector<8x1xf32>
    %c0_5 = arith.constant 0 : index
    %c0_6 = arith.constant 0 : index
    %10 = vector.load %arg4[%c0_5, %c0_6] : memref<8x1xf32, #tpu.memory_space<vmem>>, vector<8x1xf32>
    tpu.vector_store %arg4[%c0_5, %c0_6], %9 {strides = array<i32>} : memref<8x1xf32, #tpu.memory_space<vmem>>, vector<8x1xf32>,
    %cst_7 = arith.constant dense<0.000000e+00> : vector<8xf32>
    %11 = vector.multi_reduction <add>, %6, %cst_7 [1] : vector<8x32xf32> to vector<8xf32>
    %12 = vector.shape_cast %11 : vector<8xf32> to vector<8x1xf32>
    %c0_8 = arith.constant 0 : index
    %c0_9 = arith.constant 0 : index
    %13 = vector.load %arg5[%c0_8, %c0_9] : memref<8x1xf32, #tpu.memory_space<vmem>>, vector<8x1xf32>
    tpu.vector_store %arg5[%c0_8, %c0_9], %12 {strides = array<i32>} : memref<8x1xf32, #tpu.memory_space<vmem>>, vector<8x1xf32>,
    %cst_10 = arith.constant dense<0.000000e+00> : vector<1x8xf32>
    %14 = tpu.matmul %7, %5, %cst_10 {dimension_numbers = #tpu.dot_dimension_numbers<[1], [1], [0], [0], [0, 0, 1, 0], [], []>} : vector<1x32xf32>, vector<8x32xf32>, vector<1x8xf32> -> vector<1x8xf32>
    %c0_11 = arith.constant 0 : index
    %c0_12 = arith.constant 0 : index
    %15 = vector.load %arg6[%c0_11, %c0_12] : memref<1x8xf32, #tpu.memory_space<vmem>>, vector<1x8xf32>
    tpu.vector_store %arg6[%c0_11, %c0_12], %14 {strides = array<i32>} : memref<1x8xf32, #tpu.memory_space<vmem>>, vector<1x8xf32>,
    %cst_13 = arith.constant dense<0.000000e+00> : vector<1x8xf32>
    %16 = tpu.matmul %7, %6, %cst_13 {dimension_numbers = #tpu.dot_dimension_numbers<[1], [1], [0], [0], [0, 0, 1, 0], [], []>} : vector<1x32xf32>, vector<8x32xf32>, vector<1x8xf32> -> vector<1x8xf32>
    %c0_14 = arith.constant 0 : index
    %c0_15 = arith.constant 0 : index
    %17 = vector.load %arg7[%c0_14, %c0_15] : memref<1x8xf32, #tpu.memory_space<vmem>>, vector<1x8xf32>
    tpu.vector_store %arg7[%c0_14, %c0_15], %16 {strides = array<i32>} : memref<1x8xf32, #tpu.memory_space<vmem>>, vector<1x8xf32>,
    %c0_16 = arith.constant 0 : index
    %c0_17 = arith.constant 0 : index
    %18 = vector.load %arg8[%c0_16, %c0_17] : memref<1x32xf32, #tpu.memory_space<vmem>>, vector<1x32xf32>
    %cst_18 = arith.constant dense<0.000000e+00> : vector<32xf32>
    %19 = vector.multi_reduction <add>, %5, %cst_18 [0] : vector<8x32xf32> to vector<32xf32>
    %20 = vector.shape_cast %19 : vector<32xf32> to vector<1x32xf32>
    %21 = arith.addf %18, %20 : vector<1x32xf32>
    %c0_19 = arith.constant 0 : index
    %c0_20 = arith.constant 0 : index
    %22 = vector.load %arg8[%c0_19, %c0_20] : memref<1x32xf32, #tpu.memory_space<vmem>>, vector<1x32xf32>
    tpu.vector_store %arg8[%c0_19, %c0_20], %21 {strides = array<i32>} : memref<1x32xf32, #tpu.memory_space<vmem>>, vector<1x32xf32>,
    %c0_21 = arith.constant 0 : index
    %c0_22 = arith.constant 0 : index
    %23 = vector.load %arg9[%c0_21, %c0_22] : memref<1x32xf32, #tpu.memory_space<vmem>>, vector<1x32xf32>
    %cst_23 = arith.constant dense<0.000000e+00> : vector<32xf32>
    %24 = vector.multi_reduction <add>, %6, %cst_23 [0] : vector<8x32xf32> to vector<32xf32>
    %25 = vector.shape_cast %24 : vector<32xf32> to vector<1x32xf32>
    %26 = arith.addf %23, %25 : vector<1x32xf32>
    %c0_24 = arith.constant 0 : index
    %c0_25 = arith.constant 0 : index
    %27 = vector.load %arg9[%c0_24, %c0_25] : memref<1x32xf32, #tpu.memory_space<vmem>>, vector<1x32xf32>
    tpu.vector_store %arg9[%c0_24, %c0_25], %26 {strides = array<i32>} : memref<1x32xf32, #tpu.memory_space<vmem>>, vector<1x32xf32>,
    %c0_26 = arith.constant 0 : index
    %c0_27 = arith.constant 0 : index
    %28 = vector.load %arg10[%c0_26, %c0_27] : memref<1x32xf32, #tpu.memory_space<vmem>>, vector<1x32xf32>
    %cst_28 = arith.constant dense<0.000000e+00> : vector<32xf32>
    %29 = vector.multi_reduction <add>, %3, %cst_28 [0] : vector<8x32xf32> to vector<32xf32>
    %30 = vector.shape_cast %29 : vector<32xf32> to vector<1x32xf32>
    %31 = arith.addf %28, %30 : vector<1x32xf32>
    %c0_29 = arith.constant 0 : index
    %c0_30 = arith.constant 0 : index
    %32 = vector.load %arg10[%c0_29, %c0_30] : memref<1x32xf32, #tpu.memory_space<vmem>>, vector<1x32xf32>
    tpu.vector_store %arg10[%c0_29, %c0_30], %31 {strides = array<i32>} : memref<1x32xf32, #tpu.memory_space<vmem>>, vector<1x32xf32>,
    %c0_31 = arith.constant 0 : index
    %c0_32 = arith.constant 0 : index
    %33 = vector.load %arg11[%c0_31, %c0_32] : memref<1x32xf32, #tpu.memory_space<vmem>>, vector<1x32xf32>
    %cst_33 = arith.constant dense<0.000000e+00> : vector<32xf32>
    %34 = vector.multi_reduction <add>, %4, %cst_33 [0] : vector<8x32xf32> to vector<32xf32>
    %35 = vector.shape_cast %34 : vector<32xf32> to vector<1x32xf32>
    %36 = arith.addf %33, %35 : vector<1x32xf32>
    %c0_34 = arith.constant 0 : index
    %c0_35 = arith.constant 0 : index
    %37 = vector.load %arg11[%c0_34, %c0_35] : memref<1x32xf32, #tpu.memory_space<vmem>>, vector<1x32xf32>
    tpu.vector_store %arg11[%c0_34, %c0_35], %36 {strides = array<i32>} : memref<1x32xf32, #tpu.memory_space<vmem>>, vector<1x32xf32>,
    %c0_i32_36 = arith.constant 0 : i32
    %38 = arith.cmpi eq, %arg0, %c0_i32_36 : i32
    %39 = arith.extui %38 : i1 to i32
    %c0_i32_37 = arith.constant 0 : i32
    %40 = arith.cmpi ne, %39, %c0_i32_37 : i32
    scf.if %40 {
      %c0_38 = arith.constant 0 : index
      %c0_39 = arith.constant 0 : index
      %41 = vector.load %arg8[%c0_38, %c0_39] : memref<1x32xf32, #tpu.memory_space<vmem>>, vector<1x32xf32>
      %42 = vector.shape_cast %41 : vector<1x32xf32> to vector<1x1x32xf32>
      %cst_40 = arith.constant dense<0.000000e+00> : vector<1xf32>
      %43 = vector.multi_reduction <add>, %42, %cst_40 [1, 2] : vector<1x1x32xf32> to vector<1xf32>
      %44 = vector.shape_cast %43 : vector<1xf32> to vector<1x1x1xf32>
      %45 = vector.extract %44[0, 0, 0] : f32 from vector<1x1x1xf32>
      %46 = vector.broadcast %45 : f32 to vector<1x1xf32>
      %c0_41 = arith.constant 0 : index
      %c0_42 = arith.constant 0 : index
      %47 = vector.load %arg9[%c0_41, %c0_42] : memref<1x32xf32, #tpu.memory_space<vmem>>, vector<1x32xf32>
      %48 = vector.shape_cast %47 : vector<1x32xf32> to vector<1x1x32xf32>
      %cst_43 = arith.constant dense<0.000000e+00> : vector<1xf32>
      %49 = vector.multi_reduction <add>, %48, %cst_43 [1, 2] : vector<1x1x32xf32> to vector<1xf32>
      %50 = vector.shape_cast %49 : vector<1xf32> to vector<1x1x1xf32>
      %51 = vector.extract %50[0, 0, 0] : f32 from vector<1x1x1xf32>
      %52 = vector.broadcast %51 : f32 to vector<1x1xf32>
      %c0_44 = arith.constant 0 : index
      %c0_45 = arith.constant 0 : index
      %53 = vector.load %arg10[%c0_44, %c0_45] : memref<1x32xf32, #tpu.memory_space<vmem>>, vector<1x32xf32>
      %c0_46 = arith.constant 0 : index
      %c0_47 = arith.constant 0 : index
      %54 = vector.load %arg11[%c0_46, %c0_47] : memref<1x32xf32, #tpu.memory_space<vmem>>, vector<1x32xf32>
      %55 = arith.mulf %53, %53 : vector<1x32xf32>
      %56 = vector.shape_cast %55 : vector<1x32xf32> to vector<1x1x32xf32>
      %cst_48 = arith.constant dense<0.000000e+00> : vector<1xf32>
      %57 = vector.multi_reduction <add>, %56, %cst_48 [1, 2] : vector<1x1x32xf32> to vector<1xf32>
      %58 = vector.shape_cast %57 : vector<1xf32> to vector<1x1x1xf32>
      %59 = vector.extract %58[0, 0, 0] : f32 from vector<1x1x1xf32>
      %60 = vector.broadcast %59 : f32 to vector<1x1xf32>
      %61 = arith.mulf %54, %54 : vector<1x32xf32>
      %62 = vector.shape_cast %61 : vector<1x32xf32> to vector<1x1x32xf32>
      %cst_49 = arith.constant dense<0.000000e+00> : vector<1xf32>
      %63 = vector.multi_reduction <add>, %62, %cst_49 [1, 2] : vector<1x1x32xf32> to vector<1xf32>
      %64 = vector.shape_cast %63 : vector<1xf32> to vector<1x1x1xf32>
      %65 = vector.extract %64[0, 0, 0] : f32 from vector<1x1x1xf32>
      %66 = vector.broadcast %65 : f32 to vector<1x1xf32>
      %67 = arith.mulf %53, %54 : vector<1x32xf32>
      %68 = vector.shape_cast %67 : vector<1x32xf32> to vector<1x1x32xf32>
      %cst_50 = arith.constant dense<0.000000e+00> : vector<1xf32>
      %69 = vector.multi_reduction <add>, %68, %cst_50 [1, 2] : vector<1x1x32xf32> to vector<1xf32>
      %70 = vector.shape_cast %69 : vector<1xf32> to vector<1x1x1xf32>
      %71 = vector.extract %70[0, 0, 0] : f32 from vector<1x1x1xf32>
      %72 = vector.broadcast %71 : f32 to vector<1x1xf32>
      %cst_51 = arith.constant 1.600000e+01 : f32
      %73 = vector.broadcast %cst_51 : f32 to vector<1x1xf32>
      %74 = arith.mulf %73, %46 : vector<1x1xf32>
      %cst_52 = arith.constant 2.000000e+00 : f32
      %75 = vector.broadcast %cst_52 : f32 to vector<1x1xf32>
      %76 = arith.mulf %75, %60 : vector<1x1xf32>
      %77 = arith.subf %74, %76 : vector<1x1xf32>
      %cst_53 = arith.constant 1.600000e+01 : f32
      %78 = vector.broadcast %cst_53 : f32 to vector<1x1xf32>
      %79 = arith.mulf %78, %52 : vector<1x1xf32>
      %cst_54 = arith.constant 2.000000e+00 : f32
      %80 = vector.broadcast %cst_54 : f32 to vector<1x1xf32>
      %81 = arith.mulf %80, %66 : vector<1x1xf32>
      %82 = arith.subf %79, %81 : vector<1x1xf32>
      %cst_55 = arith.constant 8.000000e+00 : f32
      %83 = vector.broadcast %cst_55 : f32 to vector<1x1xf32>
      %84 = arith.mulf %83, %46 : vector<1x1xf32>
      %cst_56 = arith.constant 8.000000e+00 : f32
      %85 = vector.broadcast %cst_56 : f32 to vector<1x1xf32>
      %86 = arith.mulf %85, %52 : vector<1x1xf32>
      %87 = arith.addf %84, %86 : vector<1x1xf32>
      %cst_57 = arith.constant 2.000000e+00 : f32
      %88 = vector.broadcast %cst_57 : f32 to vector<1x1xf32>
      %89 = arith.mulf %88, %72 : vector<1x1xf32>
      %90 = arith.subf %87, %89 : vector<1x1xf32>
      %91 = arith.addf %77, %82 : vector<1x1xf32>
      %cst_58 = arith.constant 2.000000e+00 : f32
      %92 = vector.broadcast %cst_58 : f32 to vector<1x1xf32>
      %93 = arith.mulf %92, %90 : vector<1x1xf32>
      %94 = arith.addf %91, %93 : vector<1x1xf32>
      %cst_59 = arith.constant 2.400000e+02 : f32
      %95 = vector.broadcast %cst_59 : f32 to vector<1x1xf32>
      %96 = arith.divf %94, %95 : vector<1x1xf32>
      %c0_60 = arith.constant 0 : index
      %c0_61 = arith.constant 0 : index
      %97 = vector.load %arg3[%c0_60, %c0_61] : memref<1x1xf32, #tpu.memory_space<vmem>>, vector<1x1xf32>
      tpu.vector_store %arg3[%c0_60, %c0_61], %96 {strides = array<i32>} : memref<1x1xf32, #tpu.memory_space<vmem>>, vector<1x1xf32>,
    } else {
    }
    return
  }
  func.func @transform_0(%arg0: i32) -> (i32, i32) {
    %c0_i32 = arith.constant 0 : i32
    %c0_i32_0 = arith.constant 0 : i32
    return %arg0, %c0_i32 : i32, i32
  }
  func.func @transform_1(%arg0: i32) -> (i32, i32) {
    %c0_i32 = arith.constant 0 : i32
    %c0_i32_0 = arith.constant 0 : i32
    return %arg0, %c0_i32 : i32, i32
  }
  func.func @transform_2(%arg0: i32) -> (i32, i32) {
    %c0_i32 = arith.constant 0 : i32
    %c0_i32_0 = arith.constant 0 : i32
    %c0_i32_1 = arith.constant 0 : i32
    return %c0_i32, %c0_i32_0 : i32, i32
  }
  func.func @transform_3(%arg0: i32) -> (i32, i32) {
    %c0_i32 = arith.constant 0 : i32
    %c0_i32_0 = arith.constant 0 : i32
    return %arg0, %c0_i32 : i32, i32
  }
  func.func @transform_4(%arg0: i32) -> (i32, i32) {
    %c0_i32 = arith.constant 0 : i32
    %c0_i32_0 = arith.constant 0 : i32
    return %arg0, %c0_i32 : i32, i32
  }
  func.func @transform_5(%arg0: i32) -> (i32, i32) {
    %c0_i32 = arith.constant 0 : i32
    %c0_i32_0 = arith.constant 0 : i32
    return %c0_i32, %arg0 : i32, i32
  }
  func.func @transform_6(%arg0: i32) -> (i32, i32) {
    %c0_i32 = arith.constant 0 : i32
    %c0_i32_0 = arith.constant 0 : i32
    return %c0_i32, %arg0 : i32, i32
  }
}

</mosaic_0001>

<llo_original>
// kernel: efficient_rbf.3
$region0: #{efficient_rbf.3}
  #allocation0 [shape = 'u32[]', space=smem, size = 0x4, offset = 0x4, fixed_abs, tag = 'smem constant byte address 0x4 - core index']
  #allocation1 [shape = 'u32[72,128]{1,0:T(1,128)}', space=vmem, size = 0x9000, scoped, tag = 'internal scratch']
  #allocation2 [shape = 'f32[1,1]{1,0:T(1,128)S(6)}', space=smem, size = 0x200, scoped, tag = 'scoped memory for efficient_rbf.3']
  %s0 = inlined_call_operand.<no memory space> [shape: f32[1,1], index: 0, kind: input, shape index: {}]
  %s1 = inlined_call_operand.hbm [shape: f32[8,32], index: 1, kind: input, shape index: {}, may-alias: {1,2}]
  %s2 = inlined_call_operand.hbm [shape: f32[8,32], index: 2, kind: input, shape index: {}, may-alias: {1,2}]
  %s3 = inlined_call_operand.hbm [shape: f32[8,32], index: 3, kind: input, shape index: {}, may-alias: {3,4}]
  %s4 = inlined_call_operand.hbm [shape: f32[8,32], index: 4, kind: input, shape index: {}, may-alias: {3,4}]
  %s5 = inlined_call_operand.vmem [shape: f32[8,1], index: 5, kind: input, shape index: {}]
  %s6 = inlined_call_operand.vmem [shape: f32[1,8], index: 6, kind: input, shape index: {}]
  %s7 = inlined_call_operand.vmem [shape: f32[8,1], index: 7, kind: input, shape index: {}]
  %s8 = inlined_call_operand.vmem [shape: f32[1,8], index: 8, kind: input, shape index: {}]
  %s9 = inlined_call_operand.hbm [shape: f32[8,8], index: 9, kind: output, shape index: {0}]
  %s10 = inlined_call_operand.hbm [shape: f32[8,8], index: 10, kind: output, shape index: {1}]
  %s11 = inlined_call_operand.hbm [shape: f32[8,8], index: 11, kind: output, shape index: {2}]
  %12 = xla_tuple %s9, %s10, %s11
  %s13 = sld [smem:[#allocation0]]
  $region78: #{efficient_rbf.3} parent=0
    _
  %s15 = ssub.s32 1, %s13
  %s16 = scalar_select 0, %s15, %s13
  %17 = sst [smem:[#allocation2]] %s0
  $region1: #{efficient_rbf.3} parent=0
    #allocation3 [shape = 'u8[4096]{0}', space=vmem, size = 0x1000, scoped, tag = 'input window, operand 1, single buffered']
    #allocation4 [shape = 's32[1]{0}', space=sflag, size = 0x4, scoped, tag = 'scoped memory for efficient_rbf.3']
    #allocation5 [shape = 's32[1]{0}', space=sflag, size = 0x4, scoped, tag = 'scoped memory for efficient_rbf.3']
    #allocation6 [shape = 'u8[4096]{0}', space=vmem, size = 0x1000, scoped, tag = 'input window, operand 2, single buffered']
    #allocation7 [shape = 's32[1]{0}', space=sflag, size = 0x4, scoped, tag = 'scoped memory for efficient_rbf.3']
    #allocation8 [shape = 'u8[4096]{0}', space=vmem, size = 0x1000, scoped, tag = 'input window, operand 3, single buffered']
    #allocation9 [shape = 'u8[4096]{0}', space=vmem, size = 0x1000, scoped, tag = 'input window, operand 4, single buffered']
    #allocation10 [shape = 's32[1]{0}', space=sflag, size = 0x4, scoped, tag = 'scoped memory for efficient_rbf.3']
    #allocation11 [shape = 'u8[4096]{0}', space=vmem, size = 0x1000, scoped, tag = 'output window, operand 0, single buffered']
    #allocation12 [shape = 'u8[4096]{0}', space=vmem, size = 0x1000, scoped, tag = 'output window, operand 1, single buffered']
    #allocation13 [shape = 's32[1]{0}', space=sflag, size = 0x4, scoped, tag = 'scoped memory for efficient_rbf.3']
    #allocation14 [shape = 'u8[4096]{0}', space=vmem, size = 0x1000, scoped, tag = 'output window, operand 2, single buffered']
    %18 = vsyncpa [#allocation4], 0
    %19 = vsyncpa [#allocation7], 0
    %20 = vsyncpa [#allocation10], 0
    %21 = vsyncpa [#allocation5], 0
    %22 = vsyncpa [#allocation13], 0
    // Predicated region
    $region2: #{efficient_rbf.3} parent=1 // pred_check
      _
    $region3: #{efficient_rbf.3} parent=1 // pred_check_branch
      %24 = sbr.rel (0) target = $region5
    $region4: #{efficient_rbf.3} parent=1 // pred_region
      _
    $region5: #{efficient_rbf.3} parent=1 // pred_fallthru
      _
    // Predicated region
    $region6: #{efficient_rbf.3} parent=1 // pred_check
      _
    $region7: #{efficient_rbf.3} parent=1 // pred_check_branch
      %26 = sbr.rel (0) target = $region9
    $region8: #{efficient_rbf.3} parent=1 // pred_region
      %28 = vsyncadd [#allocation4], 0
      %s30 = sshll.u32 %s1, 4
      %s31 = int_to_ptr.hbm [resolvable:$true] %s30
      %s32 = sshll.u32 [#allocation3], 4
      %s33 = int_to_ptr.vmem [resolvable:$true] %s32
      %35 = dma.hbm_to_vmem [thread:$0]  %s31, 128, %s33, [#allocation4]
    $region9: #{efficient_rbf.3} parent=1 // pred_fallthru
      _
    // Predicated region
    $region10: #{efficient_rbf.3} parent=1 // pred_check
      _
    $region11: #{efficient_rbf.3} parent=1 // pred_check_branch
      %37 = sbr.rel (0) target = $region13
    $region12: #{efficient_rbf.3} parent=1 // pred_region
      %39 = vsyncadd [#allocation7], 0
      %s41 = sshll.u32 %s2, 4
      %s42 = int_to_ptr.hbm [resolvable:$true] %s41
      %s43 = sshll.u32 [#allocation6], 4
      %s44 = int_to_ptr.vmem [resolvable:$true] %s43
      %46 = dma.hbm_to_vmem [thread:$0]  %s42, 128, %s44, [#allocation7]
    $region13: #{efficient_rbf.3} parent=1 // pred_fallthru
      _
    // Predicated region
    $region14: #{efficient_rbf.3} parent=1 // pred_check
      _
    $region15: #{efficient_rbf.3} parent=1 // pred_check_branch
      %48 = sbr.rel (0) target = $region17
    $region16: #{efficient_rbf.3} parent=1 // pred_region
      %50 = vsyncadd [#allocation7], 0
      %s52 = sshll.u32 %s3, 4
      %s53 = int_to_ptr.hbm [resolvable:$true] %s52
      %s54 = sshll.u32 [#allocation8], 4
      %s55 = int_to_ptr.vmem [resolvable:$true] %s54
      %57 = dma.hbm_to_vmem [thread:$0]  %s53, 128, %s55, [#allocation7]
    $region17: #{efficient_rbf.3} parent=1 // pred_fallthru
      _
    // Predicated region
    $region18: #{efficient_rbf.3} parent=1 // pred_check
      _
    $region19: #{efficient_rbf.3} parent=1 // pred_check_branch
      %59 = sbr.rel (0) target = $region21
    $region20: #{efficient_rbf.3} parent=1 // pred_region
      %61 = vsyncadd [#allocation10], 0
      %s63 = sshll.u32 %s4, 4
      %s64 = int_to_ptr.hbm [resolvable:$true] %s63
      %s65 = sshll.u32 [#allocation9], 4
      %s66 = int_to_ptr.vmem [resolvable:$true] %s65
      %68 = dma.hbm_to_vmem [thread:$0]  %s64, 128, %s66, [#allocation10]
    $region21: #{efficient_rbf.3} parent=1 // pred_fallthru
      _
    // Predicated region
    $region22: #{efficient_rbf.3} parent=1 // pred_check
      _
    $region23: #{efficient_rbf.3} parent=1 // pred_check_branch
      %70 = sbr.rel (0) target = $region25
    $region24: #{efficient_rbf.3} parent=1 // pred_region
      _
    $region25: #{efficient_rbf.3} parent=1 // pred_fallthru
      _
    // Predicated region
    $region26: #{efficient_rbf.3} parent=1 // pred_check
      _
    $region27: #{efficient_rbf.3} parent=1 // pred_check_branch
      %72 = sbr.rel (0) target = $region29
    $region28: #{efficient_rbf.3} parent=1 // pred_region
      _
    $region29: #{efficient_rbf.3} parent=1 // pred_fallthru
      _
    // Predicated region
    $region30: #{efficient_rbf.3} parent=1 // pred_check
      _
    $region31: #{efficient_rbf.3} parent=1 // pred_check_branch
      %74 = sbr.rel (0) target = $region33
    $region32: #{efficient_rbf.3} parent=1 // pred_region
      _
    $region33: #{efficient_rbf.3} parent=1 // pred_fallthru
      _
    // Predicated region
    $region34: #{efficient_rbf.3} parent=1 // pred_check
      _
    $region35: #{efficient_rbf.3} parent=1 // pred_check_branch
      %76 = sbr.rel (0) target = $region37
    $region36: #{efficient_rbf.3} parent=1 // pred_region
      _
    $region37: #{efficient_rbf.3} parent=1 // pred_fallthru
      _
    // Predicated region
    $region38: #{efficient_rbf.3} parent=1 // pred_check
      _
    $region39: #{efficient_rbf.3} parent=1 // pred_check_branch
      %78 = sbr.rel (0) target = $region41
    $region40: #{efficient_rbf.3} parent=1 // pred_region
      %80 = dma.done [#allocation4], 128
    $region41: #{efficient_rbf.3} parent=1 // pred_fallthru
      _
    // Predicated region
    $region42: #{efficient_rbf.3} parent=1 // pred_check
      _
    $region43: #{efficient_rbf.3} parent=1 // pred_check_branch
      %82 = sbr.rel (0) target = $region45
    $region44: #{efficient_rbf.3} parent=1 // pred_region
      %84 = dma.done [#allocation7], 128
    $region45: #{efficient_rbf.3} parent=1 // pred_fallthru
      _
    // Predicated region
    $region46: #{efficient_rbf.3} parent=1 // pred_check
      _
    $region47: #{efficient_rbf.3} parent=1 // pred_check_branch
      %86 = sbr.rel (0) target = $region49
    $region48: #{efficient_rbf.3} parent=1 // pred_region
      %88 = dma.done [#allocation7], 128
    $region49: #{efficient_rbf.3} parent=1 // pred_fallthru
      _
    // Predicated region
    $region50: #{efficient_rbf.3} parent=1 // pred_check
      _
    $region51: #{efficient_rbf.3} parent=1 // pred_check_branch
      %90 = sbr.rel (0) target = $region53
    $region52: #{efficient_rbf.3} parent=1 // pred_region
      %92 = dma.done [#allocation10], 128
    $region53: #{efficient_rbf.3} parent=1 // pred_fallthru
      _
    %s93 = sld [smem:[#allocation2]]
    %v94 = vld [vmem:[#allocation3] sm:$0xff]
    %v95 = vld [vmem:[#allocation6] sm:$0xff]
    %vm96 = vcmask 261120
    %v98 = vsel %vm96, %v94, 0
    %v101 = vsel %vm96, %v95, 0
    %103 = vmatpush.xpose.msra.mxu0 0.0
    %104 = vmatpush.xpose.msra.mxu0 0.0
    %105 = vmatpush.xpose.msra.mxu0 0.0
    %106 = vmatpush.xpose.msra.mxu0 0.0
    %107 = vmatpush.xpose.msra.mxu0 0.0
    %108 = vmatpush.xpose.msra.mxu0 0.0
    %109 = vmatpush.xpose.msra.mxu0 0.0
    %110 = vmatpush.xpose.msra.mxu0 0.0
    %111 = vmatpush.xpose.msra.mxu0 0.0
    %112 = vmatpush.xpose.msra.mxu0 0.0
    %113 = vmatpush.xpose.msra.mxu0 0.0
    %114 = vmatpush.xpose.msra.mxu0 0.0
    %115 = vmatpush.xpose.msra.mxu0 0.0
    %116 = vmatpush.xpose.msra.mxu0 0.0
    %117 = vmatpush.xpose.msra.mxu0 0.0
    %118 = vmatpush.xpose.msra.mxu0 %v101
    %119 = vmatmul.f32.gmra.mxu0 %v98
    %v120 = vpop.f32.mrf.mxu0
    %v121 = vadd.f32 0.0, %v120
    %122 = vdwg.mxu0
    %v123 = vld [vmem:[#allocation8] sm:$0xff]
    %v124 = vld [vmem:[#allocation9] sm:$0xff]
    %v126 = vsel %vm96, %v123, 0
    %v129 = vsel %vm96, %v124, 0
    %131 = vmatpush.xpose.msra.mxu0 0.0
    %132 = vmatpush.xpose.msra.mxu0 0.0
    %133 = vmatpush.xpose.msra.mxu0 0.0
    %134 = vmatpush.xpose.msra.mxu0 0.0
    %135 = vmatpush.xpose.msra.mxu0 0.0
    %136 = vmatpush.xpose.msra.mxu0 0.0
    %137 = vmatpush.xpose.msra.mxu0 0.0
    %138 = vmatpush.xpose.msra.mxu0 0.0
    %139 = vmatpush.xpose.msra.mxu0 0.0
    %140 = vmatpush.xpose.msra.mxu0 0.0
    %141 = vmatpush.xpose.msra.mxu0 0.0
    %142 = vmatpush.xpose.msra.mxu0 0.0
    %143 = vmatpush.xpose.msra.mxu0 0.0
    %144 = vmatpush.xpose.msra.mxu0 0.0
    %145 = vmatpush.xpose.msra.mxu0 0.0
    %146 = vmatpush.xpose.msra.mxu0 %v129
    %147 = vmatmul.f32.gmra.mxu0 %v126
    %v148 = vpop.f32.mrf.mxu0
    %v149 = vadd.f32 0.0, %v148
    %150 = vdwg.mxu0
    %151 = vmatpush.xpose.msra.mxu0 0.0
    %152 = vmatpush.xpose.msra.mxu0 0.0
    %153 = vmatpush.xpose.msra.mxu0 0.0
    %154 = vmatpush.xpose.msra.mxu0 0.0
    %155 = vmatpush.xpose.msra.mxu0 0.0
    %156 = vmatpush.xpose.msra.mxu0 0.0
    %157 = vmatpush.xpose.msra.mxu0 0.0
    %158 = vmatpush.xpose.msra.mxu0 0.0
    %159 = vmatpush.xpose.msra.mxu0 0.0
    %160 = vmatpush.xpose.msra.mxu0 0.0
    %161 = vmatpush.xpose.msra.mxu0 0.0
    %162 = vmatpush.xpose.msra.mxu0 0.0
    %163 = vmatpush.xpose.msra.mxu0 0.0
    %164 = vmatpush.xpose.msra.mxu0 0.0
    %165 = vmatpush.xpose.msra.mxu0 0.0
    %166 = vmatpush.xpose.msra.mxu0 %v129
    %167 = vmatmul.f32.gmra.mxu0 %v98
    %v168 = vpop.f32.mrf.mxu0
    %v169 = vadd.f32 0.0, %v168
    %170 = vdwg.mxu0
    %v171 = vld [vmem:[%s5] sm:$0xff]
    %v172 = vld [vmem:[%s7] sm:$0xff]
    %v173 = vld [vmem:[%s6] sm:$0x1]
    %v174 = vld [vmem:[%s8] sm:$0x1]
    %176 = vset.pattern.permute.xlu0 0
    %177 = vperm.xlu0 %176, %v171
    %v178 = vpop.permute.xlu0 %177
    %v181 = vperm.slane %v173, 0
    %v183 = vadd.f32 %v178, %v181
    %v184 = vmul.f32 %v121, 2.0
    %v185 = vsub.f32 %v183, %v184
    %v186 = vmax.f32 %v185, 0.0
    %188 = vset.pattern.permute.xlu0 0
    %189 = vperm.xlu0 %188, %v172
    %v190 = vpop.permute.xlu0 %189
    %v193 = vperm.slane %v174, 0
    %v195 = vadd.f32 %v190, %v193
    %v196 = vmul.f32 %v149, 2.0
    %v197 = vsub.f32 %v195, %v196
    %v198 = vmax.f32 %v197, 0.0
    %v199 = vadd.f32 %v178, %v193
    %v200 = vmul.f32 %v169, 2.0
    %v201 = vsub.f32 %v199, %v200
    %v202 = vmax.f32 %v201, 0.0
    %s203 = smul.f32 %s93, 4.0
    %v204 = vstv %s203
    %v205 = vrcp.pop %v204
    %v206 = vmul.f32 %v204, %v205
    %v207 = vsub.f32 1.0, %v206
    %v208 = vmul.f32 %v205, %v207
    %v209 = vadd.f32 %v205, %v208
    %vm210 = vweird.f32 %v204
    %vm211 = vweird.f32 %v205
    %vm212 = vmor %vm210, %vm211
    %v213 = vsel %vm212, %v205, %v209
    %v214 = vand.u32 2147483647, %v204
    %vm215 = vcmp.eq.f32.partialorder %v214, 8.507059e+37
    %v216 = vand.u32 %v204, 2147483648
    %v217 = vor.u32 1.1754944e-38, %v216
    %v218 = vsel %vm215, %v217, %v213
    %s219 = vtos %v218
    %v220 = vsub.f32 0.0, %v186
    %v221 = vstv %s219
    %v222 = vmul.f32 %v220, %v221
    %v223 = vmul.f32 %v222, 1.442695
    %v224 = vpow.pop %v223
    %v225 = vmul.f32 %v224, %v224
    %v226 = vadd.f32 %v224, %v225
    %v227 = vmul.f32 %v225, %v225
    %v228 = vadd.f32 %v226, %v227
    %v229 = vmul.f32 %v227, %v227
    %v230 = vadd.f32 %v228, %v229
    %v231 = vmul.f32 %v229, %v229
    %v232 = vadd.f32 %v230, %v231
    %vm233 = vcmask 64512
    %234 = vst.msk [vmem:[#allocation11] sm:$0xff] %vm233, %v232
    %v235 = vsub.f32 0.0, %v202
    %v236 = vmul.f32 %v235, %v221
    %v237 = vmul.f32 %v236, 1.442695
    %v238 = vpow.pop %v237
    %v239 = vmul.f32 %v238, %v238
    %v240 = vadd.f32 %v238, %v239
    %v241 = vmul.f32 %v239, %v239
    %v242 = vadd.f32 %v240, %v241
    %v243 = vmul.f32 %v241, %v241
    %v244 = vadd.f32 %v242, %v243
    %v245 = vmul.f32 %v243, %v243
    %v246 = vadd.f32 %v244, %v245
    %247 = vst.msk [vmem:[#allocation12] sm:$0xff] %vm233, %v246
    %v248 = vsub.f32 0.0, %v198
    %v249 = vmul.f32 %v248, %v221
    %v250 = vmul.f32 %v249, 1.442695
    %v251 = vpow.pop %v250
    %v252 = vmul.f32 %v251, %v251
    %v253 = vadd.f32 %v251, %v252
    %v254 = vmul.f32 %v252, %v252
    %v255 = vadd.f32 %v253, %v254
    %v256 = vmul.f32 %v254, %v254
    %v257 = vadd.f32 %v255, %v256
    %v258 = vmul.f32 %v256, %v256
    %v259 = vadd.f32 %v257, %v258
    %260 = vst.msk [vmem:[#allocation14] sm:$0xff] %vm233, %v259
    // Predicated region
    $region54: #{efficient_rbf.3} parent=1 // pred_check
      _
    $region55: #{efficient_rbf.3} parent=1 // pred_check_branch
      %262 = sbr.rel (0) target = $region57
    $region56: #{efficient_rbf.3} parent=1 // pred_region
      %264 = vsyncadd [#allocation5], 0
      %s266 = sshll.u32 [#allocation11], 4
      %s267 = int_to_ptr.vmem [resolvable:$true] %s266
      %s268 = sshll.u32 %s9, 4
      %s269 = int_to_ptr.hbm [resolvable:$true] %s268
      %271 = dma.vmem_to_hbm [thread:$0]  %s267, 128, %s269, [#allocation5]
    $region57: #{efficient_rbf.3} parent=1 // pred_fallthru
      _
    // Predicated region
    $region58: #{efficient_rbf.3} parent=1 // pred_check
      _
    $region59: #{efficient_rbf.3} parent=1 // pred_check_branch
      %273 = sbr.rel (0) target = $region61
    $region60: #{efficient_rbf.3} parent=1 // pred_region
      %275 = vsyncadd [#allocation13], 0
      %s277 = sshll.u32 [#allocation12], 4
      %s278 = int_to_ptr.vmem [resolvable:$true] %s277
      %s279 = sshll.u32 %s10, 4
      %s280 = int_to_ptr.hbm [resolvable:$true] %s279
      %282 = dma.vmem_to_hbm [thread:$0]  %s278, 128, %s280, [#allocation13]
    $region61: #{efficient_rbf.3} parent=1 // pred_fallthru
      _
    // Predicated region
    $region62: #{efficient_rbf.3} parent=1 // pred_check
      _
    $region63: #{efficient_rbf.3} parent=1 // pred_check_branch
      %284 = sbr.rel (0) target = $region65
    $region64: #{efficient_rbf.3} parent=1 // pred_region
      %286 = vsyncadd [#allocation13], 0
      %s288 = sshll.u32 [#allocation14], 4
      %s289 = int_to_ptr.vmem [resolvable:$true] %s288
      %s290 = sshll.u32 %s11, 4
      %s291 = int_to_ptr.hbm [resolvable:$true] %s290
      %293 = dma.vmem_to_hbm [thread:$0]  %s289, 128, %s291, [#allocation13]
    $region65: #{efficient_rbf.3} parent=1 // pred_fallthru
      _
    // Predicated region
    $region66: #{efficient_rbf.3} parent=1 // pred_check
      _
    $region67: #{efficient_rbf.3} parent=1 // pred_check_branch
      %295 = sbr.rel (0) target = $region69
    $region68: #{efficient_rbf.3} parent=1 // pred_region
      %297 = dma.done [#allocation5], 128
    $region69: #{efficient_rbf.3} parent=1 // pred_fallthru
      _
    // Predicated region
    $region70: #{efficient_rbf.3} parent=1 // pred_check
      _
    $region71: #{efficient_rbf.3} parent=1 // pred_check_branch
      %299 = sbr.rel (0) target = $region73
    $region72: #{efficient_rbf.3} parent=1 // pred_region
      %301 = dma.done [#allocation13], 128
    $region73: #{efficient_rbf.3} parent=1 // pred_fallthru
      _
    // Predicated region
    $region74: #{efficient_rbf.3} parent=1 // pred_check
      _
    $region75: #{efficient_rbf.3} parent=1 // pred_check_branch
      %303 = sbr.rel (0) target = $region77
    $region76: #{efficient_rbf.3} parent=1 // pred_region
      %305 = dma.done [#allocation13], 128
    $region77: #{efficient_rbf.3} parent=1 // pred_fallthru
      _
    %306 = vsyncpa [#allocation4], 1
    %307 = vsyncpa [#allocation7], 1
    %308 = vsyncpa [#allocation10], 1
    %309 = vsyncpa [#allocation5], 1
    %310 = vsyncpa [#allocation13], 1

// kernel: efficient_rbf.2
$region0: #{efficient_rbf.2}
  #allocation0 [shape = 'u32[]', space=smem, size = 0x4, offset = 0x4, fixed_abs, tag = 'smem constant byte address 0x4 - core index']
  #allocation1 [shape = 'u32[72,128]{1,0:T(1,128)}', space=vmem, size = 0x9000, scoped, tag = 'internal scratch']
  #allocation2 [shape = 'f32[1,32]{1,0:T(1,128)}', space=vmem, size = 0x200, scoped, tag = 'scratch operand']
  #allocation3 [shape = 'f32[1,32]{1,0:T(1,128)}', space=vmem, size = 0x200, scoped, tag = 'scratch operand']
  #allocation4 [shape = 'f32[1,32]{1,0:T(1,128)}', space=vmem, size = 0x200, scoped, tag = 'scratch operand']
  #allocation5 [shape = 'f32[1,32]{1,0:T(1,128)}', space=vmem, size = 0x200, scoped, tag = 'scratch operand']
  %s0 = inlined_call_operand.hbm [shape: f32[8,32], index: 0, kind: input, shape index: {}]
  %s1 = inlined_call_operand.hbm [shape: f32[8,32], index: 1, kind: input, shape index: {}]
  %s2 = inlined_call_operand.hbm [shape: f32[1,1], index: 2, kind: output, shape index: {0}]
  %s3 = inlined_call_operand.vmem [shape: f32[8,1], index: 3, kind: output, shape index: {1}]
  %s4 = inlined_call_operand.vmem [shape: f32[8,1], index: 4, kind: output, shape index: {2}]
  %s5 = inlined_call_operand.vmem [shape: f32[1,8], index: 5, kind: output, shape index: {3}]
  %s6 = inlined_call_operand.vmem [shape: f32[1,8], index: 6, kind: output, shape index: {4}]
  %7 = xla_tuple %s2, %s3, %s4, %s5, %s6
  %s8 = sld [smem:[#allocation0]]
  $region66: #{efficient_rbf.2} parent=0
    _
  %s10 = ssub.s32 1, %s8
  %s11 = scalar_select 0, %s10, %s8
  $region1: #{efficient_rbf.2} parent=0
    #allocation6 [shape = 'u8[4096]{0}', space=vmem, size = 0x1000, scoped, tag = 'input window, operand 0, single buffered']
    #allocation7 [shape = 's32[1]{0}', space=sflag, size = 0x4, scoped, tag = 'scoped memory for efficient_rbf.2']
    #allocation8 [shape = 's32[1]{0}', space=sflag, size = 0x4, scoped, tag = 'scoped memory for efficient_rbf.2']
    #allocation9 [shape = 'u8[4096]{0}', space=vmem, size = 0x1000, scoped, tag = 'input window, operand 1, single buffered']
    #allocation10 [shape = 's32[1]{0}', space=sflag, size = 0x4, scoped, tag = 'scoped memory for efficient_rbf.2']
    #allocation11 [shape = 'u8[512]{0}', space=vmem, size = 0x400, scoped, tag = 'output window, operand 0, single buffered']
    %12 = vsyncpa [#allocation7], 0
    %13 = vsyncpa [#allocation10], 0
    %14 = vsyncpa [#allocation8], 0
    // Predicated region
    $region2: #{efficient_rbf.2} parent=1 // pred_check
      _
    $region3: #{efficient_rbf.2} parent=1 // pred_check_branch
      %16 = sbr.rel (0) target = $region5
    $region4: #{efficient_rbf.2} parent=1 // pred_region
      %18 = vsyncadd [#allocation7], 0
      %s20 = sshll.u32 %s0, 4
      %s21 = int_to_ptr.hbm [resolvable:$true] %s20
      %s22 = sshll.u32 [#allocation6], 4
      %s23 = int_to_ptr.vmem [resolvable:$true] %s22
      %25 = dma.hbm_to_vmem [thread:$0]  %s21, 128, %s23, [#allocation7]
    $region5: #{efficient_rbf.2} parent=1 // pred_fallthru
      _
    // Predicated region
    $region6: #{efficient_rbf.2} parent=1 // pred_check
      _
    $region7: #{efficient_rbf.2} parent=1 // pred_check_branch
      %27 = sbr.rel (0) target = $region9
    $region8: #{efficient_rbf.2} parent=1 // pred_region
      %29 = vsyncadd [#allocation10], 0
      %s31 = sshll.u32 %s1, 4
      %s32 = int_to_ptr.hbm [resolvable:$true] %s31
      %s33 = sshll.u32 [#allocation9], 4
      %s34 = int_to_ptr.vmem [resolvable:$true] %s33
      %36 = dma.hbm_to_vmem [thread:$0]  %s32, 128, %s34, [#allocation10]
    $region9: #{efficient_rbf.2} parent=1 // pred_fallthru
      _
    // Predicated region
    $region10: #{efficient_rbf.2} parent=1 // pred_check
      _
    $region11: #{efficient_rbf.2} parent=1 // pred_check_branch
      %38 = sbr.rel (0) target = $region13
    $region12: #{efficient_rbf.2} parent=1 // pred_region
      %40 = dma.done [#allocation7], 128
    $region13: #{efficient_rbf.2} parent=1 // pred_fallthru
      _
    // Predicated region
    $region14: #{efficient_rbf.2} parent=1 // pred_check
      _
    $region15: #{efficient_rbf.2} parent=1 // pred_check_branch
      %42 = sbr.rel (0) target = $region17
    $region16: #{efficient_rbf.2} parent=1 // pred_region
      %44 = dma.done [#allocation10], 128
    $region17: #{efficient_rbf.2} parent=1 // pred_fallthru
      _
    %p45 = scmp.eq.s32.totalorder 0, 0
    // Predicated region
    $region18: #{efficient_rbf.2} parent=1 // pred_check
      %p46 = pneg %p45
    $region19: #{efficient_rbf.2} parent=1 // pred_check_branch
      %48 = sbr.rel (%p46) target = $region21
    $region20: #{efficient_rbf.2} parent=1 // pred_region
      %vm49 = vcmask 253952
      %50 = vst.msk [vmem:[#allocation2] sm:$0x1] %vm49, 0.0
      %51 = vst.msk [vmem:[#allocation3] sm:$0x1] %vm49, 0.0
      %52 = vst.msk [vmem:[#allocation4] sm:$0x1] %vm49, 0.0
      %53 = vst.msk [vmem:[#allocation5] sm:$0x1] %vm49, 0.0
    $region21: #{efficient_rbf.2} parent=1 // pred_fallthru
      _
    %v54 = vld [vmem:[#allocation6] sm:$0xff]
    %v55 = vld [vmem:[#allocation9] sm:$0xff]
    %v56 = vmul.f32 %v54, %v54
    %v57 = vmul.f32 %v55, %v55
    %vm58 = vcmask 261120
    %v59 = vsel %vm58, %v56, 0.0
    %60 = vadd.xlane.f32.xlu0 %v59
    %v61 = vpop.xlane.xlu0 %60
    %vm62 = vcmask 7168
    %63 = vst.msk [vmem:[%s3] sm:$0xff] %vm62, %v61
    %v64 = vsel %vm58, %v57, 0.0
    %65 = vadd.xlane.f32.xlu0 %v64
    %v66 = vpop.xlane.xlu0 %65
    %67 = vst.msk [vmem:[%s4] sm:$0xff] %vm62, %v66
    %v69 = vsel %vm58, 1.0, 0
    %v72 = vsel %vm58, %v56, 0
    %74 = vmatpush.xpose.msra.mxu0 0.0
    %75 = vmatpush.xpose.msra.mxu0 0.0
    %76 = vmatpush.xpose.msra.mxu0 0.0
    %77 = vmatpush.xpose.msra.mxu0 0.0
    %78 = vmatpush.xpose.msra.mxu0 0.0
    %79 = vmatpush.xpose.msra.mxu0 0.0
    %80 = vmatpush.xpose.msra.mxu0 0.0
    %81 = vmatpush.xpose.msra.mxu0 0.0
    %82 = vmatpush.xpose.msra.mxu0 0.0
    %83 = vmatpush.xpose.msra.mxu0 0.0
    %84 = vmatpush.xpose.msra.mxu0 0.0
    %85 = vmatpush.xpose.msra.mxu0 0.0
    %86 = vmatpush.xpose.msra.mxu0 0.0
    %87 = vmatpush.xpose.msra.mxu0 0.0
    %88 = vmatpush.xpose.msra.mxu0 0.0
    %89 = vmatpush.xpose.msra.mxu0 %v72
    %90 = vmatmul.f32.gmra.mxu0 %v69
    %v91 = vpop.f32.mrf.mxu0
    %v92 = vadd.f32 0.0, %v91
    %93 = vdwg.mxu0
    %vm94 = vcmask 57344
    %95 = vst.msk [vmem:[%s5] sm:$0x1] %vm94, %v92
    %v97 = vsel %vm58, %v57, 0
    %99 = vmatpush.xpose.msra.mxu0 0.0
    %100 = vmatpush.xpose.msra.mxu0 0.0
    %101 = vmatpush.xpose.msra.mxu0 0.0
    %102 = vmatpush.xpose.msra.mxu0 0.0
    %103 = vmatpush.xpose.msra.mxu0 0.0
    %104 = vmatpush.xpose.msra.mxu0 0.0
    %105 = vmatpush.xpose.msra.mxu0 0.0
    %106 = vmatpush.xpose.msra.mxu0 0.0
    %107 = vmatpush.xpose.msra.mxu0 0.0
    %108 = vmatpush.xpose.msra.mxu0 0.0
    %109 = vmatpush.xpose.msra.mxu0 0.0
    %110 = vmatpush.xpose.msra.mxu0 0.0
    %111 = vmatpush.xpose.msra.mxu0 0.0
    %112 = vmatpush.xpose.msra.mxu0 0.0
    %113 = vmatpush.xpose.msra.mxu0 0.0
    %114 = vmatpush.xpose.msra.mxu0 %v97
    %115 = vmatmul.f32.gmra.mxu0 %v69
    %v116 = vpop.f32.mrf.mxu0
    %v117 = vadd.f32 0.0, %v116
    %118 = vdwg.mxu0
    %119 = vst.msk [vmem:[%s6] sm:$0x1] %vm94, %v117
    %v120 = vld [vmem:[#allocation2] sm:$0x1]
    %v121 = vrot.slane %v59, 4
    %v122 = vadd.f32 %v59, %v121
    %v123 = vrot.slane %v122, 2
    %v124 = vadd.f32 %v122, %v123
    %v125 = vrot.slane %v124, 1
    %v126 = vadd.f32 %v124, %v125
    %v127 = vadd.f32 %v120, %v126
    %vm128 = vcmask 253952
    %129 = vst.msk [vmem:[#allocation2] sm:$0x1] %vm128, %v127
    %v130 = vld [vmem:[#allocation3] sm:$0x1]
    %v131 = vrot.slane %v64, 4
    %v132 = vadd.f32 %v64, %v131
    %v133 = vrot.slane %v132, 2
    %v134 = vadd.f32 %v132, %v133
    %v135 = vrot.slane %v134, 1
    %v136 = vadd.f32 %v134, %v135
    %v137 = vadd.f32 %v130, %v136
    %138 = vst.msk [vmem:[#allocation3] sm:$0x1] %vm128, %v137
    %v139 = vld [vmem:[#allocation4] sm:$0x1]
    %v140 = vsel %vm58, %v54, 0.0
    %v141 = vrot.slane %v140, 4
    %v142 = vadd.f32 %v140, %v141
    %v143 = vrot.slane %v142, 2
    %v144 = vadd.f32 %v142, %v143
    %v145 = vrot.slane %v144, 1
    %v146 = vadd.f32 %v144, %v145
    %v147 = vadd.f32 %v139, %v146
    %148 = vst.msk [vmem:[#allocation4] sm:$0x1] %vm128, %v147
    %v149 = vld [vmem:[#allocation5] sm:$0x1]
    %v150 = vsel %vm58, %v55, 0.0
    %v151 = vrot.slane %v150, 4
    %v152 = vadd.f32 %v150, %v151
    %v153 = vrot.slane %v152, 2
    %v154 = vadd.f32 %v152, %v153
    %v155 = vrot.slane %v154, 1
    %v156 = vadd.f32 %v154, %v155
    %v157 = vadd.f32 %v149, %v156
    %158 = vst.msk [vmem:[#allocation5] sm:$0x1] %vm128, %v157
    // Predicated region
    $region22: #{efficient_rbf.2} parent=1 // pred_check
      %p159 = pneg %p45
    $region23: #{efficient_rbf.2} parent=1 // pred_check_branch
      %161 = sbr.rel (%p159) target = $region25
    $region24: #{efficient_rbf.2} parent=1 // pred_region
      %v162 = vld [vmem:[#allocation2] sm:$0x1]
      %v163 = vsel %vm128, %v162, 0.0
      %164 = vadd.xlane.f32.xlu0 %v163
      %v165 = vpop.xlane.xlu0 %164
      %v166 = vrot.slane %v165, 4
      %v167 = vadd.f32 %v165, %v166
      %v168 = vrot.slane %v167, 2
      %v169 = vadd.f32 %v167, %v168
      %v170 = vrot.slane %v169, 1
      %v171 = vadd.f32 %v169, %v170
      %s172 = vtos %v171
      %v173 = vstv %s172
      %v174 = vld [vmem:[#allocation3] sm:$0x1]
      %v175 = vsel %vm128, %v174, 0.0
      %176 = vadd.xlane.f32.xlu0 %v175
      %v177 = vpop.xlane.xlu0 %176
      %v178 = vrot.slane %v177, 4
      %v179 = vadd.f32 %v177, %v178
      %v180 = vrot.slane %v179, 2
      %v181 = vadd.f32 %v179, %v180
      %v182 = vrot.slane %v181, 1
      %v183 = vadd.f32 %v181, %v182
      %s184 = vtos %v183
      %v185 = vstv %s184
      %v186 = vld [vmem:[#allocation4] sm:$0x1]
      %v187 = vld [vmem:[#allocation5] sm:$0x1]
      %v188 = vmul.f32 %v186, %v186
      %v189 = vsel %vm128, %v188, 0.0
      %190 = vadd.xlane.f32.xlu0 %v189
      %v191 = vpop.xlane.xlu0 %190
      %v192 = vrot.slane %v191, 4
      %v193 = vadd.f32 %v191, %v192
      %v194 = vrot.slane %v193, 2
      %v195 = vadd.f32 %v193, %v194
      %v196 = vrot.slane %v195, 1
      %v197 = vadd.f32 %v195, %v196
      %s198 = vtos %v197
      %v199 = vstv %s198
      %v200 = vmul.f32 %v187, %v187
      %v201 = vsel %vm128, %v200, 0.0
      %202 = vadd.xlane.f32.xlu0 %v201
      %v203 = vpop.xlane.xlu0 %202
      %v204 = vrot.slane %v203, 4
      %v205 = vadd.f32 %v203, %v204
      %v206 = vrot.slane %v205, 2
      %v207 = vadd.f32 %v205, %v206
      %v208 = vrot.slane %v207, 1
      %v209 = vadd.f32 %v207, %v208
      %s210 = vtos %v209
      %v211 = vstv %s210
      %v212 = vmul.f32 %v186, %v187
      %v213 = vsel %vm128, %v212, 0.0
      %214 = vadd.xlane.f32.xlu0 %v213
      %v215 = vpop.xlane.xlu0 %214
      %v216 = vrot.slane %v215, 4
      %v217 = vadd.f32 %v215, %v216
      %v218 = vrot.slane %v217, 2
      %v219 = vadd.f32 %v217, %v218
      %v220 = vrot.slane %v219, 1
      %v221 = vadd.f32 %v219, %v220
      %s222 = vtos %v221
      %v223 = vstv %s222
      %v224 = vmul.f32 %v173, 16.0
      %v225 = vmul.f32 %v199, 2.0
      %v226 = vsub.f32 %v224, %v225
      %v227 = vmul.f32 %v185, 16.0
      %v228 = vmul.f32 %v211, 2.0
      %v229 = vsub.f32 %v227, %v228
      %v230 = vmul.f32 %v173, 8.0
      %v231 = vmul.f32 %v185, 8.0
      %v232 = vadd.f32 %v230, %v231
      %v233 = vmul.f32 %v223, 2.0
      %v234 = vsub.f32 %v232, %v233
      %v235 = vadd.f32 %v226, %v229
      %v236 = vmul.f32 %v234, 2.0
      %v237 = vadd.f32 %v235, %v236
      %v238 = vrcp.pop 240.0
      %v239 = vmul.f32 240.0, %v238
      %v240 = vsub.f32 1.0, %v239
      %v241 = vmul.f32 %v238, %v240
      %v242 = vadd.f32 %v238, %v241
      %vm243 = vweird.f32 %v238
      %v244 = vsel %vm243, %v238, %v242
      %v245 = vmul.f32 %v237, %v244
      %vm246 = vcmask 0
      %247 = vst.msk [vmem:[#allocation11] sm:$0x1] %vm246, %v245
    $region25: #{efficient_rbf.2} parent=1 // pred_fallthru
      _
    // Predicated region
    $region26: #{efficient_rbf.2} parent=1 // pred_check
      _
    $region27: #{efficient_rbf.2} parent=1 // pred_check_branch
      %249 = sbr.rel (0) target = $region29
    $region28: #{efficient_rbf.2} parent=1 // pred_region
      %251 = vsyncadd [#allocation8], 0
      %s253 = sshll.u32 [#allocation11], 4
      %s254 = int_to_ptr.vmem [resolvable:$true] %s253
      %s255 = sshll.u32 %s2, 4
      %s256 = int_to_ptr.hbm [resolvable:$true] %s255
      %258 = dma.vmem_to_hbm [thread:$0]  %s254, 16, %s256, [#allocation8]
    $region29: #{efficient_rbf.2} parent=1 // pred_fallthru
      _
    // Predicated region
    $region30: #{efficient_rbf.2} parent=1 // pred_check
      _
    $region31: #{efficient_rbf.2} parent=1 // pred_check_branch
      %260 = sbr.rel (0) target = $region33
    $region32: #{efficient_rbf.2} parent=1 // pred_region
      _
    $region33: #{efficient_rbf.2} parent=1 // pred_fallthru
      _
    // Predicated region
    $region34: #{efficient_rbf.2} parent=1 // pred_check
      _
    $region35: #{efficient_rbf.2} parent=1 // pred_check_branch
      %262 = sbr.rel (0) target = $region37
    $region36: #{efficient_rbf.2} parent=1 // pred_region
      _
    $region37: #{efficient_rbf.2} parent=1 // pred_fallthru
      _
    // Predicated region
    $region38: #{efficient_rbf.2} parent=1 // pred_check
      _
    $region39: #{efficient_rbf.2} parent=1 // pred_check_branch
      %264 = sbr.rel (0) target = $region41
    $region40: #{efficient_rbf.2} parent=1 // pred_region
      _
    $region41: #{efficient_rbf.2} parent=1 // pred_fallthru
      _
    // Predicated region
    $region42: #{efficient_rbf.2} parent=1 // pred_check
      _
    $region43: #{efficient_rbf.2} parent=1 // pred_check_branch
      %266 = sbr.rel (0) target = $region45
    $region44: #{efficient_rbf.2} parent=1 // pred_region
      _
    $region45: #{efficient_rbf.2} parent=1 // pred_fallthru
      _
    // Predicated region
    $region46: #{efficient_rbf.2} parent=1 // pred_check
      _
    $region47: #{efficient_rbf.2} parent=1 // pred_check_branch
      %268 = sbr.rel (0) target = $region49
    $region48: #{efficient_rbf.2} parent=1 // pred_region
      %270 = dma.done [#allocation8], 16
    $region49: #{efficient_rbf.2} parent=1 // pred_fallthru
      _
    // Predicated region
    $region50: #{efficient_rbf.2} parent=1 // pred_check
      _
    $region51: #{efficient_rbf.2} parent=1 // pred_check_branch
      %272 = sbr.rel (0) target = $region53
    $region52: #{efficient_rbf.2} parent=1 // pred_region
      _
    $region53: #{efficient_rbf.2} parent=1 // pred_fallthru
      _
    // Predicated region
    $region54: #{efficient_rbf.2} parent=1 // pred_check
      _
    $region55: #{efficient_rbf.2} parent=1 // pred_check_branch
      %274 = sbr.rel (0) target = $region57
    $region56: #{efficient_rbf.2} parent=1 // pred_region
      _
    $region57: #{efficient_rbf.2} parent=1 // pred_fallthru
      _
    // Predicated region
    $region58: #{efficient_rbf.2} parent=1 // pred_check
      _
    $region59: #{efficient_rbf.2} parent=1 // pred_check_branch
      %276 = sbr.rel (0) target = $region61
    $region60: #{efficient_rbf.2} parent=1 // pred_region
      _
    $region61: #{efficient_rbf.2} parent=1 // pred_fallthru
      _
    // Predicated region
    $region62: #{efficient_rbf.2} parent=1 // pred_check
      _
    $region63: #{efficient_rbf.2} parent=1 // pred_check_branch
      %278 = sbr.rel (0) target = $region65
    $region64: #{efficient_rbf.2} parent=1 // pred_region
      _
    $region65: #{efficient_rbf.2} parent=1 // pred_fallthru
      _
    %279 = vsyncpa [#allocation7], 1
    %280 = vsyncpa [#allocation10], 1
    %281 = vsyncpa [#allocation8], 1

</llo_original>
